<compile_context>
chip_gen: v6e
topology: v6e:2x2x1
jax: 0.10.0
libtpu: 0.0.40
codegen_flags: <defaults>
</compile_context>

<pallas_src>
from functools import partial

import numpy as np
import jax
import jax.numpy as jnp
from jax.experimental import pallas as pl
from jax.experimental.pallas import tpu as pltpu


def _psf_conv_kernel(w_ref, x_ref, o_ref, xr_ref, *, k, pad, H, W, separable):
    """One block of bc planes: fused replicate pad + k x k cross-correlation.

    w_ref  : SMEM weights. general: (k, k); separable: (2, k) rows = (u, v)
    x_ref  : (bc, H, W)  unpadded input planes in VMEM (native dtype)
    o_ref  : (bc, H, W)  output planes in VMEM
    xr_ref : (bc, H+2p, W+2p) f32 VMEM scratch holding the replicate-padded planes
    """
    bc = x_ref.shape[0]
    x = x_ref[...].astype(jnp.float32)          # single widen, hoisted out of the tap loops

    # ---- fused replicate padding, written once into the f32 scratch ----------
    Hp, Wp = H + 2 * pad, W + 2 * pad
    xr_ref[:, pad:pad + H, pad:pad + W] = x
    if pad > 0:
        # left / right edge strips over the central rows
        xr_ref[:, pad:pad + H, 0:pad] = jnp.broadcast_to(x[:, :, 0:1], (bc, H, pad))
        xr_ref[:, pad:pad + H, pad + W:Wp] = jnp.broadcast_to(x[:, :, W - 1:W], (bc, H, pad))
        # top / bottom rows replicate the already column-padded first/last rows
        top = xr_ref[:, pad:pad + 1, :]
        bot = xr_ref[:, pad + H - 1:pad + H, :]
        xr_ref[:, 0:pad, :] = jnp.broadcast_to(top, (bc, pad, Wp))
        xr_ref[:, Hp - pad:Hp, :] = jnp.broadcast_to(bot, (bc, pad, Wp))

    # ---- f32 accumulation; column shifts are static slices of the scratch ----
    acc = None
    if separable:
        # w == outer(u, v): column pass with v, then row pass with u.
        t = None
        for j in range(k):
            term = xr_ref[:, :, j:j + W] * w_ref[1, j]
            t = term if t is None else t + term
        for i in range(k):
            term = t[:, i:i + H, :] * w_ref[0, i]
            acc = term if acc is None else acc + term
    else:
        for j in range(k):
            cj = xr_ref[:, :, j:j + W]            # (bc, Hp, W) window at lane offset j
            for i in range(k):
                term = cj[:, i:i + H, :] * w_ref[i, j]   # only the H rows actually used
                acc = term if acc is None else acc + term

    o_ref[...] = acc.astype(o_ref.dtype)          # single store per block


def _vmem_capacity_bytes():
    try:
        cap = int(pltpu.get_tpu_info().vmem_capacity_bytes)
        if cap > 0:
            return cap
    except Exception:
        pass
    return 64 << 20   # conservative: v7x physical VMEM per TensorCore


def _choose_block(P, H, W, pad, itemsize, vmem_cap):
    """Pick planes-per-block and an explicit VMEM limit."""
    Hp, Wp = H + 2 * pad, W + 2 * pad
    # Per-plane working set: double-buffered in+out blocks (native dtype)
    # + f32 padded scratch + ~3 f32 slab-sized temporaries (window/t, acc, x).
    per_plane = 4 * H * W * itemsize + 4 * Hp * Wp * 4
    budget = min(vmem_cap // 2, 64 << 20)         # ~8 MiB input blocks on 128 MiB parts,
    bc = int(max(1, min(P, budget // max(1, per_plane))))   # ~4 MiB on v7x

    def nsteps(b):
        return -(-P // b)

    if nsteps(bc) < 4:
        b4 = -(-P // 4)
        if b4 >= 1 and b4 * H * W * itemsize >= (1 << 20):
            bc = min(bc, b4)            # >= 4 grid steps: 2 per v7x TensorCore
        elif nsteps(bc) < 2 and P >= 2:
            bc = min(bc, -(-P // 2))    # at least 2 steps so the pipeline overlaps

    need = bc * per_plane + (4 << 20)
    vmem_limit = int(max(32 << 20, min(need, (vmem_cap * 4) // 5)))
    return bc, vmem_limit


def _separable_factors(kernel_psf, tol=1e-6):
    """Return (u, v) with outer(u, v) == kernel_psf if it is (numerically) rank-1."""
    try:
        w = np.asarray(kernel_psf, dtype=np.float64)
        if w.ndim != 2 or w.shape[0] != w.shape[1]:
            return None
        U, S, Vt = np.linalg.svd(w)
        if S.size > 1 and S[1] > tol * max(S[0], 1e-30):
            return None
        u = (U[:, 0] * S[0]).astype(np.float32)
        v = Vt[0, :].astype(np.float32)
        if not np.allclose(np.outer(u, v), w,
                           atol=1e-6 * max(1.0, float(np.abs(w).max())), rtol=1e-5):
            return None
        return u, v
    except Exception:
        return None


def psf_forward(x, kernel_psf, pad_mode="replicate"):
    """Pallas TPU implementation of PSF.forward for 2D PSFs (NCHW input)."""
    assert kernel_psf.ndim == 2, "only 2D PSF kernels implemented"
    kh, kw = int(kernel_psf.shape[0]), int(kernel_psf.shape[1])
    assert kh == kw, "square PSF kernel expected"
    k = kh
    assert k % 2 == 1, "odd PSF kernel expected (matches PyTorch symmetric padding)"
    assert pad_mode == "replicate", "only 'replicate' padding is fused in-kernel"

    N, C, H, W = x.shape
    pad = (k - 1) // 2
    assert pad < H and pad < W, "PSF padding must be smaller than the spatial dims"

    P = N * C
    xs = x.reshape(P, H, W)            # every channel of every batch shares the PSF

    # Lane-dense output: edge-pad W up to a multiple of 128 when cheap (<=12.5%
    # extra traffic). Exact: the in-kernel replicate clamp lands on columns that
    # already equal x[..., W-1] thanks to the edge-mode wrapper pad.
    Wk, w_extra = W, 0
    if W % 128 != 0:
        extra = (-W) % 128
        if extra * 8 <= W:
            xs = jnp.pad(xs, ((0, 0), (0, 0), (0, extra)), mode="edge")
            Wk, w_extra = W + extra, extra

    # Separable (rank-1) PSF fast path: 2k instead of k^2 taps per element.
    fac = _separable_factors(kernel_psf)
    if fac is not None:
        u, v = fac
        w_arg = jnp.asarray(np.stack([u, v], axis=0), jnp.float32)   # (2, k)
        separable = True
    else:
        w_arg = jnp.asarray(kernel_psf, jnp.float32)                 # (k, k)
        separable = False

    itemsize = int(x.dtype.itemsize)
    bc, vmem_limit = _choose_block(P, H, Wk, pad, itemsize, _vmem_capacity_bytes())
    grid = (pl.cdiv(P, bc),)

    out = pl.pallas_call(
        partial(_psf_conv_kernel, k=k, pad=pad, H=H, W=Wk, separable=separable),
        out_shape=jax.ShapeDtypeStruct((P, H, Wk), x.dtype),
        grid=grid,
        in_specs=[
            pl.BlockSpec(memory_space=pltpu.SMEM),               # PSF weights (scalars)
            pl.BlockSpec((bc, H, Wk), lambda p: (p, 0, 0)),      # unpadded input planes
        ],
        out_specs=pl.BlockSpec((bc, H, Wk), lambda p: (p, 0, 0)),
        scratch_shapes=[pltpu.VMEM((bc, H + 2 * pad, Wk + 2 * pad), jnp.float32)],
        compiler_params=pltpu.CompilerParams(
            dimension_semantics=("parallel",),
            vmem_limit_bytes=vmem_limit,
        ),
    )(w_arg, xs)

    if w_extra:
        out = out[:, :, :W]
    return out.reshape(N, C, H, W)


def psf_reference(x, kernel_psf):
    """Pure-JAX reference: replicate pad + depthwise cross-correlation."""
    N, C, H, W = x.shape
    k = int(kernel_psf.shape[0])
    pad = (k - 1) // 2
    xp = jnp.pad(x, ((0, 0), (0, 0), (pad, pad), (pad, pad)), mode="edge")
    w = jnp.broadcast_to(jnp.asarray(kernel_psf, jnp.float32), (C, 1, k, k))
    return jax.lax.conv_general_dilated(
        xp.astype(jnp.float32), w, window_strides=(1, 1), padding="VALID",
        dimension_numbers=("NCHW", "OIHW", "NCHW"), feature_group_count=C,
        precision=jax.lax.Precision.HIGHEST,
    ).astype(x.dtype)


if __name__ == "__main__":
    # --- Test 1: separable 5x5 Gaussian PSF (25 <= 100 -> direct conv path), f32.
    N, C, H, W = 2, 4, 16, 16
    x = jax.random.normal(jax.random.PRNGKey(0), (N, C, H, W), jnp.float32)
    k = 5
    ax = np.arange(k, dtype=np.float64) - (k - 1) / 2.0
    g = np.exp(-(ax ** 2) / (2.0 * 1.5 ** 2))
    kernel_psf = np.outer(g, g)
    kernel_psf = (kernel_psf / kernel_psf.sum()).astype(np.float32)

    out = psf_forward(x, kernel_psf)
    jax.block_until_ready(out)
    ref = psf_reference(x, kernel_psf)
    assert out.shape == (N, C, H, W)
    assert jnp.allclose(out, ref, atol=1e-5, rtol=1e-5), "mismatch (separable path)"

    # --- Test 2: non-separable 3x3 PSF, odd spatial sizes, ragged plane grid, f32.
    x2 = jax.random.normal(jax.random.PRNGKey(1), (1, 3, 17, 19), jnp.float32)
    k2 = np.array([[0.05, 0.10, 0.05],
                   [0.10, 0.30, 0.02],
                   [0.05, 0.02, 0.31]], np.float32)
    out2 = psf_forward(x2, k2)
    jax.block_until_ready(out2)
    ref2 = psf_reference(x2, k2)
    assert jnp.allclose(out2, ref2, atol=1e-5, rtol=1e-5), "mismatch (general path)"

    # --- Test 3: bf16 input through the same kernel (f32 accumulation in-kernel).
    xb = x.astype(jnp.bfloat16)
    outb = psf_forward(xb, kernel_psf)
    jax.block_until_ready(outb)
    refb = psf_reference(xb, kernel_psf)
    assert outb.dtype == jnp.bfloat16
    assert jnp.allclose(outb.astype(jnp.float32), refb.astype(jnp.float32),
                        atol=3e-2, rtol=3e-2), "mismatch (bf16 path)"

    print("KERNEL_OK")
</pallas_src>

<mosaic_0001>
module attributes {stable_mosaic.version = 11 : i64} {
  func.func @_psf_conv_kernel(%arg0: i32, %arg1: memref<2x5xf32, #tpu.memory_space<smem>>, %arg2: memref<4x16x16xf32, #tpu.memory_space<vmem>>, %arg3: memref<4x16x16xf32, #tpu.memory_space<vmem>>, %arg4: memref<4x20x20xf32, #tpu.memory_space<vmem>>) attributes {dimension_semantics = [#tpu.dimension_semantics<parallel>], iteration_bounds = array<i64: 2>, scalar_prefetch = 0 : i64, scratch_operands = 1 : i64, tpu.core_type = #tpu.core_type<tc>, window_params = [{transform_indices = @transform_0, window_bounds = array<i64: 2, 5>}, {transform_indices = @transform_1, window_bounds = array<i64: 4, 16, 16>}, {transform_indices = @transform_2, window_bounds = array<i64: 4, 16, 16>}]} {
    %c0 = arith.constant 0 : index
    %c0_0 = arith.constant 0 : index
    %c0_1 = arith.constant 0 : index
    %0 = vector.load %arg2[%c0, %c0_0, %c0_1] : memref<4x16x16xf32, #tpu.memory_space<vmem>>, vector<4x16x16xf32>
    %c0_2 = arith.constant 0 : index
    %c2 = arith.constant 2 : index
    %c2_3 = arith.constant 2 : index
    %1 = vector.load %arg4[%c0_2, %c2, %c2_3] : memref<4x20x20xf32, #tpu.memory_space<vmem>>, vector<4x16x16xf32>
    tpu.vector_store %arg4[%c0_2, %c2, %c2_3], %0 {strides = array<i32>} : memref<4x20x20xf32, #tpu.memory_space<vmem>>, vector<4x16x16xf32>,
    %2 = vector.extract_strided_slice %0 {offsets = [0, 0, 0], sizes = [4, 16, 1], strides = [1, 1, 1]} : vector<4x16x16xf32> to vector<4x16x1xf32>
    %3 = vector.shape_cast %2 : vector<4x16x1xf32> to vector<4x16x1xf32>
    %4 = vector.broadcast %3 : vector<4x16x1xf32> to vector<4x16x2xf32>
    %c0_4 = arith.constant 0 : index
    %c2_5 = arith.constant 2 : index
    %c0_6 = arith.constant 0 : index
    %5 = vector.load %arg4[%c0_4, %c2_5, %c0_6] : memref<4x20x20xf32, #tpu.memory_space<vmem>>, vector<4x16x2xf32>
    tpu.vector_store %arg4[%c0_4, %c2_5, %c0_6], %4 {strides = array<i32>} : memref<4x20x20xf32, #tpu.memory_space<vmem>>, vector<4x16x2xf32>,
    %6 = vector.extract_strided_slice %0 {offsets = [0, 0, 15], sizes = [4, 16, 1], strides = [1, 1, 1]} : vector<4x16x16xf32> to vector<4x16x1xf32>
    %7 = vector.shape_cast %6 : vector<4x16x1xf32> to vector<4x16x1xf32>
    %8 = vector.broadcast %7 : vector<4x16x1xf32> to vector<4x16x2xf32>
    %c0_7 = arith.constant 0 : index
    %c2_8 = arith.constant 2 : index
    %c18 = arith.constant 18 : index
    %9 = vector.load %arg4[%c0_7, %c2_8, %c18] : memref<4x20x20xf32, #tpu.memory_space<vmem>>, vector<4x16x2xf32>
    tpu.vector_store %arg4[%c0_7, %c2_8, %c18], %8 {strides = array<i32>} : memref<4x20x20xf32, #tpu.memory_space<vmem>>, vector<4x16x2xf32>,
    %c0_9 = arith.constant 0 : index
    %c2_10 = arith.constant 2 : index
    %c0_11 = arith.constant 0 : index
    %10 = vector.load %arg4[%c0_9, %c2_10, %c0_11] : memref<4x20x20xf32, #tpu.memory_space<vmem>>, vector<4x1x20xf32>
    %c0_12 = arith.constant 0 : index
    %c17 = arith.constant 17 : index
    %c0_13 = arith.constant 0 : index
    %11 = vector.load %arg4[%c0_12, %c17, %c0_13] : memref<4x20x20xf32, #tpu.memory_space<vmem>>, vector<4x1x20xf32>
    %12 = vector.shape_cast %10 : vector<4x1x20xf32> to vector<4x1x20xf32>
    %13 = vector.broadcast %12 : vector<4x1x20xf32> to vector<4x2x20xf32>
    %c0_14 = arith.constant 0 : index
    %c0_15 = arith.constant 0 : index
    %c0_16 = arith.constant 0 : index
    %14 = vector.load %arg4[%c0_14, %c0_15, %c0_16] : memref<4x20x20xf32, #tpu.memory_space<vmem>>, vector<4x2x20xf32>
    tpu.vector_store %arg4[%c0_14, %c0_15, %c0_16], %13 {strides = array<i32>} : memref<4x20x20xf32, #tpu.memory_space<vmem>>, vector<4x2x20xf32>,
    %15 = vector.shape_cast %11 : vector<4x1x20xf32> to vector<4x1x20xf32>
    %16 = vector.broadcast %15 : vector<4x1x20xf32> to vector<4x2x20xf32>
    %c0_17 = arith.constant 0 : index
    %c18_18 = arith.constant 18 : index
    %c0_19 = arith.constant 0 : index
    %17 = vector.load %arg4[%c0_17, %c18_18, %c0_19] : memref<4x20x20xf32, #tpu.memory_space<vmem>>, vector<4x2x20xf32>
    tpu.vector_store %arg4[%c0_17, %c18_18, %c0_19], %16 {strides = array<i32>} : memref<4x20x20xf32, #tpu.memory_space<vmem>>, vector<4x2x20xf32>,
    %c0_20 = arith.constant 0 : index
    %c0_21 = arith.constant 0 : index
    %c0_22 = arith.constant 0 : index
    %18 = vector.load %arg4[%c0_20, %c0_21, %c0_22] : memref<4x20x20xf32, #tpu.memory_space<vmem>>, vector<4x20x16xf32>
    %c1 = arith.constant 1 : index
    %c0_23 = arith.constant 0 : index
    %19 = memref.load %arg1[%c1, %c0_23] : memref<2x5xf32, #tpu.memory_space<smem>>
    %20 = vector.broadcast %19 : f32 to vector<4x20x16xf32>
    %21 = arith.mulf %18, %20 : vector<4x20x16xf32>
    %c0_24 = arith.constant 0 : index
    %c0_25 = arith.constant 0 : index
    %c1_26 = arith.constant 1 : index
    %22 = vector.load %arg4[%c0_24, %c0_25, %c1_26] : memref<4x20x20xf32, #tpu.memory_space<vmem>>, vector<4x20x16xf32>
    %c1_27 = arith.constant 1 : index
    %c1_28 = arith.constant 1 : index
    %23 = memref.load %arg1[%c1_27, %c1_28] : memref<2x5xf32, #tpu.memory_space<smem>>
    %24 = vector.broadcast %23 : f32 to vector<4x20x16xf32>
    %25 = arith.mulf %22, %24 : vector<4x20x16xf32>
    %26 = arith.addf %21, %25 : vector<4x20x16xf32>
    %c0_29 = arith.constant 0 : index
    %c0_30 = arith.constant 0 : index
    %c2_31 = arith.constant 2 : index
    %27 = vector.load %arg4[%c0_29, %c0_30, %c2_31] : memref<4x20x20xf32, #tpu.memory_space<vmem>>, vector<4x20x16xf32>
    %c1_32 = arith.constant 1 : index
    %c2_33 = arith.constant 2 : index
    %28 = memref.load %arg1[%c1_32, %c2_33] : memref<2x5xf32, #tpu.memory_space<smem>>
    %29 = vector.broadcast %28 : f32 to vector<4x20x16xf32>
    %30 = arith.mulf %27, %29 : vector<4x20x16xf32>
    %31 = arith.addf %26, %30 : vector<4x20x16xf32>
    %c0_34 = arith.constant 0 : index
    %c0_35 = arith.constant 0 : index
    %c3 = arith.constant 3 : index
    %32 = vector.load %arg4[%c0_34, %c0_35, %c3] : memref<4x20x20xf32, #tpu.memory_space<vmem>>, vector<4x20x16xf32>
    %c1_36 = arith.constant 1 : index
    %c3_37 = arith.constant 3 : index
    %33 = memref.load %arg1[%c1_36, %c3_37] : memref<2x5xf32, #tpu.memory_space<smem>>
    %34 = vector.broadcast %33 : f32 to vector<4x20x16xf32>
    %35 = arith.mulf %32, %34 : vector<4x20x16xf32>
    %36 = arith.addf %31, %35 : vector<4x20x16xf32>
    %c0_38 = arith.constant 0 : index
    %c0_39 = arith.constant 0 : index
    %c4 = arith.constant 4 : index
    %37 = vector.load %arg4[%c0_38, %c0_39, %c4] : memref<4x20x20xf32, #tpu.memory_space<vmem>>, vector<4x20x16xf32>
    %c1_40 = arith.constant 1 : index
    %c4_41 = arith.constant 4 : index
    %38 = memref.load %arg1[%c1_40, %c4_41] : memref<2x5xf32, #tpu.memory_space<smem>>
    %39 = vector.broadcast %38 : f32 to vector<4x20x16xf32>
    %40 = arith.mulf %37, %39 : vector<4x20x16xf32>
    %41 = arith.addf %36, %40 : vector<4x20x16xf32>
    %42 = vector.extract_strided_slice %41 {offsets = [0, 0, 0], sizes = [4, 16, 16], strides = [1, 1, 1]} : vector<4x20x16xf32> to vector<4x16x16xf32>
    %c0_42 = arith.constant 0 : index
    %c0_43 = arith.constant 0 : index
    %43 = memref.load %arg1[%c0_42, %c0_43] : memref<2x5xf32, #tpu.memory_space<smem>>
    %44 = vector.broadcast %43 : f32 to vector<4x16x16xf32>
    %45 = arith.mulf %42, %44 : vector<4x16x16xf32>
    %46 = vector.extract_strided_slice %41 {offsets = [0, 1, 0], sizes = [4, 16, 16], strides = [1, 1, 1]} : vector<4x20x16xf32> to vector<4x16x16xf32>
    %c0_44 = arith.constant 0 : index
    %c1_45 = arith.constant 1 : index
    %47 = memref.load %arg1[%c0_44, %c1_45] : memref<2x5xf32, #tpu.memory_space<smem>>
    %48 = vector.broadcast %47 : f32 to vector<4x16x16xf32>
    %49 = arith.mulf %46, %48 : vector<4x16x16xf32>
    %50 = arith.addf %45, %49 : vector<4x16x16xf32>
    %51 = vector.extract_strided_slice %41 {offsets = [0, 2, 0], sizes = [4, 16, 16], strides = [1, 1, 1]} : vector<4x20x16xf32> to vector<4x16x16xf32>
    %c0_46 = arith.constant 0 : index
    %c2_47 = arith.constant 2 : index
    %52 = memref.load %arg1[%c0_46, %c2_47] : memref<2x5xf32, #tpu.memory_space<smem>>
    %53 = vector.broadcast %52 : f32 to vector<4x16x16xf32>
    %54 = arith.mulf %51, %53 : vector<4x16x16xf32>
    %55 = arith.addf %50, %54 : vector<4x16x16xf32>
    %56 = vector.extract_strided_slice %41 {offsets = [0, 3, 0], sizes = [4, 16, 16], strides = [1, 1, 1]} : vector<4x20x16xf32> to vector<4x16x16xf32>
    %c0_48 = arith.constant 0 : index
    %c3_49 = arith.constant 3 : index
    %57 = memref.load %arg1[%c0_48, %c3_49] : memref<2x5xf32, #tpu.memory_space<smem>>
    %58 = vector.broadcast %57 : f32 to vector<4x16x16xf32>
    %59 = arith.mulf %56, %58 : vector<4x16x16xf32>
    %60 = arith.addf %55, %59 : vector<4x16x16xf32>
    %61 = vector.extract_strided_slice %41 {offsets = [0, 4, 0], sizes = [4, 16, 16], strides = [1, 1, 1]} : vector<4x20x16xf32> to vector<4x16x16xf32>
    %c0_50 = arith.constant 0 : index
    %c4_51 = arith.constant 4 : index
    %62 = memref.load %arg1[%c0_50, %c4_51] : memref<2x5xf32, #tpu.memory_space<smem>>
    %63 = vector.broadcast %62 : f32 to vector<4x16x16xf32>
    %64 = arith.mulf %61, %63 : vector<4x16x16xf32>
    %65 = arith.addf %60, %64 : vector<4x16x16xf32>
    %c0_52 = arith.constant 0 : index
    %c0_53 = arith.constant 0 : index
    %c0_54 = arith.constant 0 : index
    %66 = vector.load %arg3[%c0_52, %c0_53, %c0_54] : memref<4x16x16xf32, #tpu.memory_space<vmem>>, vector<4x16x16xf32>
    tpu.vector_store %arg3[%c0_52, %c0_53, %c0_54], %65 {strides = array<i32>} : memref<4x16x16xf32, #tpu.memory_space<vmem>>, vector<4x16x16xf32>,
    return
  }
  func.func @transform_0(%arg0: i32) -> (i32, i32) {
    %c0_i32 = arith.constant 0 : i32
    %c0_i32_0 = arith.constant 0 : i32
    %c0_i32_1 = arith.constant 0 : i32
    return %c0_i32, %c0_i32_0 : i32, i32
  }
  func.func @transform_1(%arg0: i32) -> (i32, i32, i32) {
    %c0_i32 = arith.constant 0 : i32
    %c0_i32_0 = arith.constant 0 : i32
    %c0_i32_1 = arith.constant 0 : i32
    return %arg0, %c0_i32, %c0_i32_0 : i32, i32, i32
  }
  func.func @transform_2(%arg0: i32) -> (i32, i32, i32) {
    %c0_i32 = arith.constant 0 : i32
    %c0_i32_0 = arith.constant 0 : i32
    %c0_i32_1 = arith.constant 0 : i32
    return %arg0, %c0_i32, %c0_i32_0 : i32, i32, i32
  }
}

</mosaic_0001>

<llo_original>
// kernel: tpu_custom_call.1
$region0: #{tpu_custom_call.1}
  #allocation0 [shape = 'u32[]', space=smem, size = 0x4, offset = 0x4, fixed_abs, tag = 'smem constant byte address 0x4 - core index']
  #allocation1 [shape = 'u32[144,128]{1,0:T(1,128)}', space=vmem, size = 0x12000, scoped, tag = 'internal scratch']
  #allocation2 [shape = 'f32[4,20,20]{2,1,0:T(8,128)}', space=vmem, size = 0xc000, scoped, tag = 'scratch operand']
  %s0 = inlined_call_operand.hbm [shape: f32[2,5], index: 0, kind: input, shape index: {}]
  %s1 = inlined_call_operand.hbm [shape: f32[8,16,16], index: 1, kind: input, shape index: {}]
  %s2 = inlined_call_operand.hbm [shape: f32[8,16,16], index: 2, kind: output, shape index: {}]
  %s3 = sld [smem:[#allocation0]]
  $region49: #{tpu_custom_call.1} parent=0
    _
  %s5 = ssub.s32 1, %s3
  %s6 = scalar_select 0, %s5, %s3
  $region1: #{tpu_custom_call.1} parent=0
    #allocation3 [shape = 'u8[1024]{0}', space=smem, size = 0x400, scoped, tag = 'input window, operand 0, single buffered']
    #allocation4 [shape = 's32[2]{0}', space=sflag, size = 0x8, scoped, tag = 'scoped memory for tpu_custom_call.1']
    #allocation5 [shape = 's32[2]{0}', space=sflag, size = 0x8, scoped, tag = 'scoped memory for tpu_custom_call.1']
    #allocation6 [shape = 's32[2]{0}', space=sflag, size = 0x8, scoped, tag = 'scoped memory for tpu_custom_call.1']
    #allocation7 [shape = 'u8[65536]{0}', space=vmem, size = 0x10000, scoped, tag = 'input window, operand 1']
    #allocation8 [shape = 'u8[65536]{0}', space=vmem, size = 0x10000, scoped, tag = 'output window, operand 0']
    %7 = vsyncpa [#allocation6], 0
    %8 = vsyncpa [#allocation4], 0
    %s9 = scalar_lea.sflag [#allocation4], 1
    %10 = vsyncpa %s9, 0
    %11 = vsyncpa [#allocation5], 0
    %s12 = scalar_lea.sflag [#allocation5], 1
    %13 = vsyncpa %s12, 0
    loop: start=0, step=1, limit=4
    $region2: #{tpu_custom_call.1} parent=1 // loop_pre_header
      _
    $region3: #{tpu_custom_call.1} parent=1 // loop_header
      %s15 = sphi 0, %s19
      %p16 = scmp.ge.s32.totalorder %s15, 4
      %s23 = sphi 0, %s23
      %s25 = sphi 0, %s23
      %s26 = sphi 0, %s25
      %s40 = sphi 0, %s26
      %s46 = sphi 0, %s48
      %s49 = sphi 0, %s46
      %s50 = sphi 0, %s49
      %s66 = sphi 0, %s50
      %s72 = sphi 0, %s74
      %s75 = sphi 0, %s72
      %s76 = sphi 0, %s75
      %s92 = sphi 0, %s76
    $region4: #{tpu_custom_call.1} parent=1 // loop_header_branch
      %18 = sbr.rel (%p16) target = $region8
    $region5: #{tpu_custom_call.1} parent=1 // loop_body
      %s20 = ssub.s32 %s15, 1
      %s21 = ssub.s32 %s15, 2
      %s22 = sadd.s32 %s15, 1
      %s24 = sadd.s32 %s23, 1
      %p27 = scmp.eq.s32.totalorder %s15, 1
      %p28 = scmp.ne.s32.totalorder %s23, %s25
      %p29 = scmp.eq.s32.totalorder %s15, 0
      %p30 = por %p28, %p29
      %p31 = scmp.ne.s32.totalorder %s23, %s25
      %p32 = scmp.eq.s32.totalorder %s20, 1
      %p33 = por %p31, %p32
      %p34 = scmp.ne.s32.totalorder %s25, %s26
      %p35 = scmp.eq.s32.totalorder %s20, 0
      %p36 = por %p34, %p35
      %p37 = scmp.ne.s32.totalorder %s25, %s26
      %p38 = scmp.eq.s32.totalorder %s21, 1
      %p39 = por %p37, %p38
      %p41 = scmp.ne.s32.totalorder %s26, %s40
      %p42 = scmp.eq.s32.totalorder %s21, 0
      %p43 = por %p41, %p42
      %s44 = ssub.s32 %s15, %s22
      %p45 = scmp.eq.s32.totalorder %s44, 0
      %s47 = sadd.s32 %s46, 1
      %s48 = scalar_select %p45, %s46, %s47
      %p51 = pneg %p45
      %p52 = scmp.eq.s32.totalorder %s15, 1
      %p53 = por %p51, %p52
      %p54 = scmp.ne.s32.totalorder %s46, %s49
      %p55 = scmp.eq.s32.totalorder %s15, 0
      %p56 = por %p54, %p55
      %p57 = scmp.ne.s32.totalorder %s46, %s49
      %p58 = scmp.eq.s32.totalorder %s20, 1
      %p59 = por %p57, %p58
      %p60 = scmp.ne.s32.totalorder %s49, %s50
      %p61 = scmp.eq.s32.totalorder %s20, 0
      %p62 = por %p60, %p61
      %p63 = scmp.ne.s32.totalorder %s49, %s50
      %p64 = scmp.eq.s32.totalorder %s21, 1
      %p65 = por %p63, %p64
      %p67 = scmp.ne.s32.totalorder %s50, %s66
      %p68 = scmp.eq.s32.totalorder %s21, 0
      %p69 = por %p67, %p68
      %s70 = ssub.s32 %s15, %s22
      %p71 = scmp.eq.s32.totalorder %s70, 0
      %s73 = sadd.s32 %s72, 1
      %s74 = scalar_select %p71, %s72, %s73
      %p77 = pneg %p71
      %p78 = scmp.eq.s32.totalorder %s15, 1
      %p79 = por %p77, %p78
      %p80 = scmp.ne.s32.totalorder %s72, %s75
      %p81 = scmp.eq.s32.totalorder %s15, 0
      %p82 = por %p80, %p81
      %p83 = scmp.ne.s32.totalorder %s72, %s75
      %p84 = scmp.eq.s32.totalorder %s20, 1
      %p85 = por %p83, %p84
      %p86 = scmp.ne.s32.totalorder %s75, %s76
      %p87 = scmp.eq.s32.totalorder %s20, 0
      %p88 = por %p86, %p87
      %p89 = scmp.ne.s32.totalorder %s75, %s76
      %p90 = scmp.eq.s32.totalorder %s21, 1
      %p91 = por %p89, %p90
      %p93 = scmp.ne.s32.totalorder %s76, %s92
      %p94 = scmp.eq.s32.totalorder %s21, 0
      %p95 = por %p93, %p94
      %p96 = scmp.le.s32.totalorder 1, %s15
      %p97 = scmp.lt.s32.totalorder %s15, 3
      %p98 = pnand %p96, %p97
      %p99 = pneg %p98
      // Predicated region
      $region9: #{tpu_custom_call.1} parent=5 // pred_check
        _
      $region10: #{tpu_custom_call.1} parent=5 // pred_check_branch
        %101 = sbr.rel (%p98) target = $region12
      $region11: #{tpu_custom_call.1} parent=5 // pred_region
        %s102 = ssub.s32 %s15, 1
        // Predicated region
        $region13: #{tpu_custom_call.1} parent=11 // pred_check
          %p103 = pneg %p36
        $region14: #{tpu_custom_call.1} parent=11 // pred_check_branch
          %105 = sbr.rel (%p103) target = $region16
        $region15: #{tpu_custom_call.1} parent=11 // pred_region
          %s107 = ssub.s32 32, 32
          %108 = vsyncadd [#allocation6], %s107
          %111 = dma.hbm_to_smem %s0, 32, [#allocation3], [#allocation6]
        $region16: #{tpu_custom_call.1} parent=11 // pred_fallthru
          _
      $region12: #{tpu_custom_call.1} parent=5 // pred_fallthru
        _
      %p112 = scmp.lt.s32.totalorder %s15, 2
      // Predicated region
      $region17: #{tpu_custom_call.1} parent=5 // pred_check
        %p113 = pneg %p112
      $region18: #{tpu_custom_call.1} parent=5 // pred_check_branch
        %115 = sbr.rel (%p113) target = $region20
      $region19: #{tpu_custom_call.1} parent=5 // pred_region
        // Predicated region
        $region21: #{tpu_custom_call.1} parent=19 // pred_check
          %p116 = pneg %p56
        $region22: #{tpu_custom_call.1} parent=19 // pred_check_branch
          %118 = sbr.rel (%p116) target = $region24
        $region23: #{tpu_custom_call.1} parent=19 // pred_region
          %s119 = sand.u32 %s46, 1
          %s120 = scalar_lea.sflag [#allocation4], %s119
          %s121 = sand.u32 %s46, 1
          %s122 = smul.addr %s121, 64
          %s123 = scalar_lea.vmem [#allocation7], %s122
          %s124 = smul.u32 4, %s15
          %s126 = ssub.s32 1024, 1024
          %127 = vsyncadd %s120, %s126
          %s128 = smul.addr %s124, 2
          %s129 = smul.addr %s128, 128
          %s130 = scalar_lea.hbm %s1, %s129
          %s131 = sshll.u32 %s123, 4
          %s132 = int_to_ptr.vmem [resolvable:$true] %s131
          %137 = dma.hbm_to_vmem [thread:$0]  %s130, 1024, %s132, %s120, 128, 128, 8
        $region24: #{tpu_custom_call.1} parent=19 // pred_fallthru
          _
      $region20: #{tpu_custom_call.1} parent=5 // pred_fallthru
        _
      %p138 = scmp.le.s32.totalorder 1, %s15
      %p139 = scmp.lt.s32.totalorder %s15, 3
      %p140 = pnand %p138, %p139
      %p141 = pneg %p140
      // Predicated region
      $region25: #{tpu_custom_call.1} parent=5 // pred_check
        _
      $region26: #{tpu_custom_call.1} parent=5 // pred_check_branch
        %143 = sbr.rel (%p140) target = $region28
      $region27: #{tpu_custom_call.1} parent=5 // pred_region
        %s144 = ssub.s32 %s15, 1
        // Predicated region
        $region29: #{tpu_custom_call.1} parent=27 // pred_check
          %p145 = pneg %p36
        $region30: #{tpu_custom_call.1} parent=27 // pred_check_branch
          %147 = sbr.rel (%p145) target = $region32
        $region31: #{tpu_custom_call.1} parent=27 // pred_region
          %148 = dma.done [#allocation6], 32
        $region32: #{tpu_custom_call.1} parent=27 // pred_fallthru
          _
        %s149 = sand.u32 %s49, 1
        %s150 = scalar_lea.sflag [#allocation4], %s149
        %s151 = sand.u32 %s49, 1
        %s152 = smul.addr %s151, 64
        %s153 = scalar_lea.vmem [#allocation7], %s152
        // Predicated region
        $region33: #{tpu_custom_call.1} parent=27 // pred_check
          %p154 = pneg %p62
        $region34: #{tpu_custom_call.1} parent=27 // pred_check_branch
          %156 = sbr.rel (%p154) target = $region36
        $region35: #{tpu_custom_call.1} parent=27 // pred_region
          %157 = dma.done %s150, 1024
        $region36: #{tpu_custom_call.1} parent=27 // pred_fallthru
          _
        %158 = sfence
        %p159 = pneg %p36
        %p160 = pneg %p33
        %s161 = sand.u32 %s49, 1
        %s162 = scalar_lea.sflag [#allocation4], %s161
        %s163 = sand.u32 %s49, 1
        %s164 = smul.addr %s163, 64
        %s165 = scalar_lea.vmem [#allocation7], %s164
        %p166 = pneg %p62
        %p167 = pneg %p59
        %p168 = pneg %p88
        %p169 = pneg %p85
        %s170 = sand.u32 %s75, 1
        %s171 = scalar_lea.sflag [#allocation5], %s170
        %s172 = sand.u32 %s75, 1
        %s173 = smul.addr %s172, 64
        %s174 = scalar_lea.vmem [#allocation8], %s173
        %s175 = smul.u32 4, %s20
        %s176 = smul.u32 4, %s20
        %v177 = vld [vmem:[%s153] sm:$0xff]
        %v178 = vld [vmem:[%s153 + $0x8] sm:$0xff]
        %v179 = vld [vmem:[%s153 + $0x10] sm:$0xff]
        %v180 = vld [vmem:[%s153 + $0x18] sm:$0xff]
        %v181 = vld [vmem:[%s153 + $0x20] sm:$0xff]
        %v182 = vld [vmem:[%s153 + $0x28] sm:$0xff]
        %v183 = vld [vmem:[%s153 + $0x30] sm:$0xff]
        %v184 = vld [vmem:[%s153 + $0x38] sm:$0xff]
        %193 = vrot.lane.b32.xlu0 %v177, 2
        %v194 = vpop.permute.xlu0 %193
        %195 = vrot.lane.b32.xlu0 %v178, 2
        %v196 = vpop.permute.xlu0 %195
        %197 = vrot.lane.b32.xlu0 %v179, 2
        %v198 = vpop.permute.xlu0 %197
        %199 = vrot.lane.b32.xlu0 %v180, 2
        %v200 = vpop.permute.xlu0 %199
        %201 = vrot.lane.b32.xlu0 %v181, 2
        %v202 = vpop.permute.xlu0 %201
        %203 = vrot.lane.b32.xlu0 %v182, 2
        %v204 = vpop.permute.xlu0 %203
        %205 = vrot.lane.b32.xlu0 %v183, 2
        %v206 = vpop.permute.xlu0 %205
        %207 = vrot.lane.b32.xlu0 %v184, 2
        %v208 = vpop.permute.xlu0 %207
        %vm217 = vcmask 146448
        %218 = vst.msk [vmem:[#allocation2 + $0x2] sm:$0xff] %vm217, %v194
        %219 = vst.msk [vmem:[#allocation2 + $0xa] sm:$0xff] %vm217, %v196
        %220 = vst.msk [vmem:[#allocation2 + $0x1a] sm:$0xff] %vm217, %v198
        %221 = vst.msk [vmem:[#allocation2 + $0x22] sm:$0xff] %vm217, %v200
        %222 = vst.msk [vmem:[#allocation2 + $0x32] sm:$0xff] %vm217, %v202
        %223 = vst.msk [vmem:[#allocation2 + $0x3a] sm:$0xff] %vm217, %v204
        %224 = vst.msk [vmem:[#allocation2 + $0x4a] sm:$0xff] %vm217, %v206
        %225 = vst.msk [vmem:[#allocation2 + $0x52] sm:$0xff] %vm217, %v208
        %226 = vset.pattern.permute.xlu0 0
        %227 = vperm.xlu0 %226, %v177
        %v228 = vpop.permute.xlu0 %227
        %230 = vset.pattern.permute.xlu0 0
        %231 = vperm.xlu0 %230, %v178
        %v232 = vpop.permute.xlu0 %231
        %234 = vset.pattern.permute.xlu0 0
        %235 = vperm.xlu0 %234, %v179
        %v236 = vpop.permute.xlu0 %235
        %238 = vset.pattern.permute.xlu0 0
        %239 = vperm.xlu0 %238, %v180
        %v240 = vpop.permute.xlu0 %239
        %242 = vset.pattern.permute.xlu0 0
        %243 = vperm.xlu0 %242, %v181
        %v244 = vpop.permute.xlu0 %243
        %246 = vset.pattern.permute.xlu0 0
        %247 = vperm.xlu0 %246, %v182
        %v248 = vpop.permute.xlu0 %247
        %250 = vset.pattern.permute.xlu0 0
        %251 = vperm.xlu0 %250, %v183
        %v252 = vpop.permute.xlu0 %251
        %254 = vset.pattern.permute.xlu0 0
        %255 = vperm.xlu0 %254, %v184
        %v256 = vpop.permute.xlu0 %255
        %vm258 = vcmask 15360
        %259 = vst.msk [vmem:[#allocation2 + $0x2] sm:$0xff] %vm258, %v228
        %260 = vst.msk [vmem:[#allocation2 + $0xa] sm:$0xff] %vm258, %v232
        %261 = vst.msk [vmem:[#allocation2 + $0x1a] sm:$0xff] %vm258, %v236
        %262 = vst.msk [vmem:[#allocation2 + $0x22] sm:$0xff] %vm258, %v240
        %263 = vst.msk [vmem:[#allocation2 + $0x32] sm:$0xff] %vm258, %v244
        %264 = vst.msk [vmem:[#allocation2 + $0x3a] sm:$0xff] %vm258, %v248
        %265 = vst.msk [vmem:[#allocation2 + $0x4a] sm:$0xff] %vm258, %v252
        %266 = vst.msk [vmem:[#allocation2 + $0x52] sm:$0xff] %vm258, %v256
        %267 = vset.pattern.permute.xlu0 15
        %268 = vperm.xlu0 %267, %v177
        %v269 = vpop.permute.xlu0 %268
        %271 = vset.pattern.permute.xlu0 15
        %272 = vperm.xlu0 %271, %v178
        %v273 = vpop.permute.xlu0 %272
        %275 = vset.pattern.permute.xlu0 15
        %276 = vperm.xlu0 %275, %v179
        %v277 = vpop.permute.xlu0 %276
        %279 = vset.pattern.permute.xlu0 15
        %280 = vperm.xlu0 %279, %v180
        %v281 = vpop.permute.xlu0 %280
        %283 = vset.pattern.permute.xlu0 15
        %284 = vperm.xlu0 %283, %v181
        %v285 = vpop.permute.xlu0 %284
        %287 = vset.pattern.permute.xlu0 15
        %288 = vperm.xlu0 %287, %v182
        %v289 = vpop.permute.xlu0 %288
        %291 = vset.pattern.permute.xlu0 15
        %292 = vperm.xlu0 %291, %v183
        %v293 = vpop.permute.xlu0 %292
        %295 = vset.pattern.permute.xlu0 15
        %296 = vperm.xlu0 %295, %v184
        %v297 = vpop.permute.xlu0 %296
        %vm299 = vcmask 162960
        %300 = vst.msk [vmem:[#allocation2 + $0x2] sm:$0xff] %vm299, %v269
        %301 = vst.msk [vmem:[#allocation2 + $0xa] sm:$0xff] %vm299, %v273
        %302 = vst.msk [vmem:[#allocation2 + $0x1a] sm:$0xff] %vm299, %v277
        %303 = vst.msk [vmem:[#allocation2 + $0x22] sm:$0xff] %vm299, %v281
        %304 = vst.msk [vmem:[#allocation2 + $0x32] sm:$0xff] %vm299, %v285
        %305 = vst.msk [vmem:[#allocation2 + $0x3a] sm:$0xff] %vm299, %v289
        %306 = vst.msk [vmem:[#allocation2 + $0x4a] sm:$0xff] %vm299, %v293
        %307 = vst.msk [vmem:[#allocation2 + $0x52] sm:$0xff] %vm299, %v297
        %v308 = vld [vmem:[#allocation2 + $0x2] sm:$0x1]
        %v309 = vld [vmem:[#allocation2 + $0x1a] sm:$0x1]
        %v310 = vld [vmem:[#allocation2 + $0x32] sm:$0x1]
        %v311 = vld [vmem:[#allocation2 + $0x4a] sm:$0x1]
        %v312 = vld [vmem:[#allocation2 + $0x11] sm:$0x1]
        %v313 = vld [vmem:[#allocation2 + $0x29] sm:$0x1]
        %v314 = vld [vmem:[#allocation2 + $0x41] sm:$0x1]
        %v315 = vld [vmem:[#allocation2 + $0x59] sm:$0x1]
        %v316 = vlaneseq
        %v317 = vshrl.u32 %v316, 7
        %v318 = vsub.s32 0, %v317
        %v319 = vrot.slane %v308, %v318
        %v320 = vlaneseq
        %v321 = vshrl.u32 %v320, 7
        %v322 = vsub.s32 0, %v321
        %v323 = vrot.slane %v309, %v322
        %v324 = vlaneseq
        %v325 = vshrl.u32 %v324, 7
        %v326 = vsub.s32 0, %v325
        %v327 = vrot.slane %v310, %v326
        %v328 = vlaneseq
        %v329 = vshrl.u32 %v328, 7
        %v330 = vsub.s32 0, %v329
        %v331 = vrot.slane %v311, %v330
        %vm332 = vcmask 156672
        %333 = vst.msk [vmem:[#allocation2] sm:$0x3] %vm332, %v319
        %334 = vst.msk [vmem:[#allocation2 + $0x18] sm:$0x3] %vm332, %v323
        %335 = vst.msk [vmem:[#allocation2 + $0x30] sm:$0x3] %vm332, %v327
        %336 = vst.msk [vmem:[#allocation2 + $0x48] sm:$0x3] %vm332, %v331
        %v337 = vlaneseq
        %v338 = vshrl.u32 %v337, 7
        %v339 = vsub.s32 0, %v338
        %v340 = vrot.slane %v312, %v339
        %v341 = vlaneseq
        %v342 = vshrl.u32 %v341, 7
        %v343 = vsub.s32 0, %v342
        %v344 = vrot.slane %v313, %v343
        %v345 = vlaneseq
        %v346 = vshrl.u32 %v345, 7
        %v347 = vsub.s32 0, %v346
        %v348 = vrot.slane %v314, %v347
        %v349 = vlaneseq
        %v350 = vshrl.u32 %v349, 7
        %v351 = vsub.s32 0, %v350
        %v352 = vrot.slane %v315, %v351
        %353 = vst.msk [vmem:[#allocation2 + $0x12] sm:$0x3] %vm332, %v340
        %354 = vst.msk [vmem:[#allocation2 + $0x2a] sm:$0x3] %vm332, %v344
        %355 = vst.msk [vmem:[#allocation2 + $0x42] sm:$0x3] %vm332, %v348
        %356 = vst.msk [vmem:[#allocation2 + $0x5a] sm:$0x3] %vm332, %v352
        %v357 = vld [vmem:[#allocation2] sm:$0xff]
        %v358 = vld [vmem:[#allocation2 + $0x8] sm:$0xff]
        %v359 = vld [vmem:[#allocation2 + $0x10] sm:$0xf]
        %v360 = vld [vmem:[#allocation2 + $0x18] sm:$0xff]
        %v361 = vld [vmem:[#allocation2 + $0x20] sm:$0xff]
        %v362 = vld [vmem:[#allocation2 + $0x28] sm:$0xf]
        %v363 = vld [vmem:[#allocation2 + $0x30] sm:$0xff]
        %v364 = vld [vmem:[#allocation2 + $0x38] sm:$0xff]
        %v365 = vld [vmem:[#allocation2 + $0x40] sm:$0xf]
        %v366 = vld [vmem:[#allocation2 + $0x48] sm:$0xff]
        %v367 = vld [vmem:[#allocation2 + $0x50] sm:$0xff]
        %v368 = vld [vmem:[#allocation2 + $0x58] sm:$0xf]
        %s369 = sld [smem:[#allocation3 + $0x80]]
        %v370 = vstv %s369
        %v371 = vmul.f32 %v357, %v370
        %v372 = vmul.f32 %v358, %v370
        %v373 = vmul.f32 %v359, %v370
        %v374 = vmul.f32 %v360, %v370
        %v375 = vmul.f32 %v361, %v370
        %v376 = vmul.f32 %v362, %v370
        %v377 = vmul.f32 %v363, %v370
        %v378 = vmul.f32 %v364, %v370
        %v379 = vmul.f32 %v365, %v370
        %v380 = vmul.f32 %v366, %v370
        %v381 = vmul.f32 %v367, %v370
        %v382 = vmul.f32 %v368, %v370
        %s383 = sld [smem:[#allocation3 + $0x81]]
        %v384 = vstv %s383
        %v385 = vmul.f32 %v357, %v384
        %v386 = vmul.f32 %v358, %v384
        %v387 = vmul.f32 %v359, %v384
        %v388 = vmul.f32 %v360, %v384
        %v389 = vmul.f32 %v361, %v384
        %v390 = vmul.f32 %v362, %v384
        %v391 = vmul.f32 %v363, %v384
        %v392 = vmul.f32 %v364, %v384
        %v393 = vmul.f32 %v365, %v384
        %v394 = vmul.f32 %v366, %v384
        %v395 = vmul.f32 %v367, %v384
        %v396 = vmul.f32 %v368, %v384
        %409 = vrot.lane.b32.xlu0 %v385, 127
        %v410 = vpop.permute.xlu0 %409
        %411 = vrot.lane.b32.xlu0 %v386, 127
        %v412 = vpop.permute.xlu0 %411
        %413 = vrot.lane.b32.xlu0 %v387, 127
        %v414 = vpop.permute.xlu0 %413
        %415 = vrot.lane.b32.xlu0 %v388, 127
        %v416 = vpop.permute.xlu0 %415
        %417 = vrot.lane.b32.xlu0 %v389, 127
        %v418 = vpop.permute.xlu0 %417
        %419 = vrot.lane.b32.xlu0 %v390, 127
        %v420 = vpop.permute.xlu0 %419
        %421 = vrot.lane.b32.xlu0 %v391, 127
        %v422 = vpop.permute.xlu0 %421
        %423 = vrot.lane.b32.xlu0 %v392, 127
        %v424 = vpop.permute.xlu0 %423
        %425 = vrot.lane.b32.xlu0 %v393, 127
        %v426 = vpop.permute.xlu0 %425
        %427 = vrot.lane.b32.xlu0 %v394, 127
        %v428 = vpop.permute.xlu0 %427
        %429 = vrot.lane.b32.xlu0 %v395, 127
        %v430 = vpop.permute.xlu0 %429
        %431 = vrot.lane.b32.xlu0 %v396, 127
        %v432 = vpop.permute.xlu0 %431
        %v445 = vadd.f32 %v371, %v410
        %v446 = vadd.f32 %v372, %v412
        %v447 = vadd.f32 %v373, %v414
        %v448 = vadd.f32 %v374, %v416
        %v449 = vadd.f32 %v375, %v418
        %v450 = vadd.f32 %v376, %v420
        %v451 = vadd.f32 %v377, %v422
        %v452 = vadd.f32 %v378, %v424
        %v453 = vadd.f32 %v379, %v426
        %v454 = vadd.f32 %v380, %v428
        %v455 = vadd.f32 %v381, %v430
        %v456 = vadd.f32 %v382, %v432
        %s457 = sld [smem:[#allocation3 + $0x82]]
        %v458 = vstv %s457
        %v459 = vmul.f32 %v357, %v458
        %v460 = vmul.f32 %v358, %v458
        %v461 = vmul.f32 %v359, %v458
        %v462 = vmul.f32 %v360, %v458
        %v463 = vmul.f32 %v361, %v458
        %v464 = vmul.f32 %v362, %v458
        %v465 = vmul.f32 %v363, %v458
        %v466 = vmul.f32 %v364, %v458
        %v467 = vmul.f32 %v365, %v458
        %v468 = vmul.f32 %v366, %v458
        %v469 = vmul.f32 %v367, %v458
        %v470 = vmul.f32 %v368, %v458
        %483 = vrot.lane.b32.xlu0 %v459, 126
        %v484 = vpop.permute.xlu0 %483
        %485 = vrot.lane.b32.xlu0 %v460, 126
        %v486 = vpop.permute.xlu0 %485
        %487 = vrot.lane.b32.xlu0 %v461, 126
        %v488 = vpop.permute.xlu0 %487
        %489 = vrot.lane.b32.xlu0 %v462, 126
        %v490 = vpop.permute.xlu0 %489
        %491 = vrot.lane.b32.xlu0 %v463, 126
        %v492 = vpop.permute.xlu0 %491
        %493 = vrot.lane.b32.xlu0 %v464, 126
        %v494 = vpop.permute.xlu0 %493
        %495 = vrot.lane.b32.xlu0 %v465, 126
        %v496 = vpop.permute.xlu0 %495
        %497 = vrot.lane.b32.xlu0 %v466, 126
        %v498 = vpop.permute.xlu0 %497
        %499 = vrot.lane.b32.xlu0 %v467, 126
        %v500 = vpop.permute.xlu0 %499
        %501 = vrot.lane.b32.xlu0 %v468, 126
        %v502 = vpop.permute.xlu0 %501
        %503 = vrot.lane.b32.xlu0 %v469, 126
        %v504 = vpop.permute.xlu0 %503
        %505 = vrot.lane.b32.xlu0 %v470, 126
        %v506 = vpop.permute.xlu0 %505
        %v519 = vadd.f32 %v445, %v484
        %v520 = vadd.f32 %v446, %v486
        %v521 = vadd.f32 %v447, %v488
        %v522 = vadd.f32 %v448, %v490
        %v523 = vadd.f32 %v449, %v492
        %v524 = vadd.f32 %v450, %v494
        %v525 = vadd.f32 %v451, %v496
        %v526 = vadd.f32 %v452, %v498
        %v527 = vadd.f32 %v453, %v500
        %v528 = vadd.f32 %v454, %v502
        %v529 = vadd.f32 %v455, %v504
        %v530 = vadd.f32 %v456, %v506
        %s531 = sld [smem:[#allocation3 + $0x83]]
        %v532 = vstv %s531
        %v533 = vmul.f32 %v357, %v532
        %v534 = vmul.f32 %v358, %v532
        %v535 = vmul.f32 %v359, %v532
        %v536 = vmul.f32 %v360, %v532
        %v537 = vmul.f32 %v361, %v532
        %v538 = vmul.f32 %v362, %v532
        %v539 = vmul.f32 %v363, %v532
        %v540 = vmul.f32 %v364, %v532
        %v541 = vmul.f32 %v365, %v532
        %v542 = vmul.f32 %v366, %v532
        %v543 = vmul.f32 %v367, %v532
        %v544 = vmul.f32 %v368, %v532
        %557 = vrot.lane.b32.xlu0 %v533, 125
        %v558 = vpop.permute.xlu0 %557
        %559 = vrot.lane.b32.xlu0 %v534, 125
        %v560 = vpop.permute.xlu0 %559
        %561 = vrot.lane.b32.xlu0 %v535, 125
        %v562 = vpop.permute.xlu0 %561
        %563 = vrot.lane.b32.xlu0 %v536, 125
        %v564 = vpop.permute.xlu0 %563
        %565 = vrot.lane.b32.xlu0 %v537, 125
        %v566 = vpop.permute.xlu0 %565
        %567 = vrot.lane.b32.xlu0 %v538, 125
        %v568 = vpop.permute.xlu0 %567
        %569 = vrot.lane.b32.xlu0 %v539, 125
        %v570 = vpop.permute.xlu0 %569
        %571 = vrot.lane.b32.xlu0 %v540, 125
        %v572 = vpop.permute.xlu0 %571
        %573 = vrot.lane.b32.xlu0 %v541, 125
        %v574 = vpop.permute.xlu0 %573
        %575 = vrot.lane.b32.xlu0 %v542, 125
        %v576 = vpop.permute.xlu0 %575
        %577 = vrot.lane.b32.xlu0 %v543, 125
        %v578 = vpop.permute.xlu0 %577
        %579 = vrot.lane.b32.xlu0 %v544, 125
        %v580 = vpop.permute.xlu0 %579
        %v593 = vadd.f32 %v519, %v558
        %v594 = vadd.f32 %v520, %v560
        %v595 = vadd.f32 %v521, %v562
        %v596 = vadd.f32 %v522, %v564
        %v597 = vadd.f32 %v523, %v566
        %v598 = vadd.f32 %v524, %v568
        %v599 = vadd.f32 %v525, %v570
        %v600 = vadd.f32 %v526, %v572
        %v601 = vadd.f32 %v527, %v574
        %v602 = vadd.f32 %v528, %v576
        %v603 = vadd.f32 %v529, %v578
        %v604 = vadd.f32 %v530, %v580
        %s605 = sld [smem:[#allocation3 + $0x84]]
        %v606 = vstv %s605
        %v607 = vmul.f32 %v357, %v606
        %v608 = vmul.f32 %v358, %v606
        %v609 = vmul.f32 %v359, %v606
        %v610 = vmul.f32 %v360, %v606
        %v611 = vmul.f32 %v361, %v606
        %v612 = vmul.f32 %v362, %v606
        %v613 = vmul.f32 %v363, %v606
        %v614 = vmul.f32 %v364, %v606
        %v615 = vmul.f32 %v365, %v606
        %v616 = vmul.f32 %v366, %v606
        %v617 = vmul.f32 %v367, %v606
        %v618 = vmul.f32 %v368, %v606
        %631 = vrot.lane.b32.xlu0 %v607, 124
        %v632 = vpop.permute.xlu0 %631
        %633 = vrot.lane.b32.xlu0 %v608, 124
        %v634 = vpop.permute.xlu0 %633
        %635 = vrot.lane.b32.xlu0 %v609, 124
        %v636 = vpop.permute.xlu0 %635
        %637 = vrot.lane.b32.xlu0 %v610, 124
        %v638 = vpop.permute.xlu0 %637
        %639 = vrot.lane.b32.xlu0 %v611, 124
        %v640 = vpop.permute.xlu0 %639
        %641 = vrot.lane.b32.xlu0 %v612, 124
        %v642 = vpop.permute.xlu0 %641
        %643 = vrot.lane.b32.xlu0 %v613, 124
        %v644 = vpop.permute.xlu0 %643
        %645 = vrot.lane.b32.xlu0 %v614, 124
        %v646 = vpop.permute.xlu0 %645
        %647 = vrot.lane.b32.xlu0 %v615, 124
        %v648 = vpop.permute.xlu0 %647
        %649 = vrot.lane.b32.xlu0 %v616, 124
        %v650 = vpop.permute.xlu0 %649
        %651 = vrot.lane.b32.xlu0 %v617, 124
        %v652 = vpop.permute.xlu0 %651
        %653 = vrot.lane.b32.xlu0 %v618, 124
        %v654 = vpop.permute.xlu0 %653
        %v667 = vadd.f32 %v593, %v632
        %v668 = vadd.f32 %v594, %v634
        %v669 = vadd.f32 %v595, %v636
        %v670 = vadd.f32 %v596, %v638
        %v671 = vadd.f32 %v597, %v640
        %v672 = vadd.f32 %v598, %v642
        %v673 = vadd.f32 %v599, %v644
        %v674 = vadd.f32 %v600, %v646
        %v675 = vadd.f32 %v601, %v648
        %v676 = vadd.f32 %v602, %v650
        %v677 = vadd.f32 %v603, %v652
        %v678 = vadd.f32 %v604, %v654
        %s679 = sld [smem:[#allocation3]]
        %v680 = vstv %s679
        %v681 = vmul.f32 %v667, %v680
        %v682 = vmul.f32 %v668, %v680
        %v683 = vmul.f32 %v670, %v680
        %v684 = vmul.f32 %v671, %v680
        %v685 = vmul.f32 %v673, %v680
        %v686 = vmul.f32 %v674, %v680
        %v687 = vmul.f32 %v676, %v680
        %v688 = vmul.f32 %v677, %v680
        %s689 = sld [smem:[#allocation3 + $0x1]]
        %v690 = vstv %s689
        %v691 = vmul.f32 %v667, %v690
        %v692 = vmul.f32 %v668, %v690
        %v693 = vmul.f32 %v669, %v690
        %v694 = vmul.f32 %v670, %v690
        %v695 = vmul.f32 %v671, %v690
        %v696 = vmul.f32 %v672, %v690
        %v697 = vmul.f32 %v673, %v690
        %v698 = vmul.f32 %v674, %v690
        %v699 = vmul.f32 %v675, %v690
        %v700 = vmul.f32 %v676, %v690
        %v701 = vmul.f32 %v677, %v690
        %v702 = vmul.f32 %v678, %v690
        %vm715 = vcmask 1046528
        %v716 = vrot.slane %v691, 1
        %v717 = vrot.slane %v692, 1
        %v718 = vsel %vm715, %v716, %v717
        %v719 = vrot.slane %v693, 1
        %v720 = vsel %vm715, %v717, %v719
        %v721 = vrot.slane %v694, 1
        %v722 = vrot.slane %v695, 1
        %v723 = vsel %vm715, %v721, %v722
        %v724 = vrot.slane %v696, 1
        %v725 = vsel %vm715, %v722, %v724
        %v726 = vrot.slane %v697, 1
        %v727 = vrot.slane %v698, 1
        %v728 = vsel %vm715, %v726, %v727
        %v729 = vrot.slane %v699, 1
        %v730 = vsel %vm715, %v727, %v729
        %v731 = vrot.slane %v700, 1
        %v732 = vrot.slane %v701, 1
        %v733 = vsel %vm715, %v731, %v732
        %v734 = vrot.slane %v702, 1
        %v735 = vsel %vm715, %v732, %v734
        %v744 = vadd.f32 %v681, %v718
        %v745 = vadd.f32 %v682, %v720
        %v746 = vadd.f32 %v683, %v723
        %v747 = vadd.f32 %v684, %v725
        %v748 = vadd.f32 %v685, %v728
        %v749 = vadd.f32 %v686, %v730
        %v750 = vadd.f32 %v687, %v733
        %v751 = vadd.f32 %v688, %v735
        %s752 = sld [smem:[#allocation3 + $0x2]]
        %v753 = vstv %s752
        %v754 = vmul.f32 %v667, %v753
        %v755 = vmul.f32 %v668, %v753
        %v756 = vmul.f32 %v669, %v753
        %v757 = vmul.f32 %v670, %v753
        %v758 = vmul.f32 %v671, %v753
        %v759 = vmul.f32 %v672, %v753
        %v760 = vmul.f32 %v673, %v753
        %v761 = vmul.f32 %v674, %v753
        %v762 = vmul.f32 %v675, %v753
        %v763 = vmul.f32 %v676, %v753
        %v764 = vmul.f32 %v677, %v753
        %v765 = vmul.f32 %v678, %v753
        %vm778 = vcmask 1045504
        %v779 = vrot.slane %v754, 2
        %v780 = vrot.slane %v755, 2
        %v781 = vsel %vm778, %v779, %v780
        %v782 = vrot.slane %v756, 2
        %v783 = vsel %vm778, %v780, %v782
        %v784 = vrot.slane %v757, 2
        %v785 = vrot.slane %v758, 2
        %v786 = vsel %vm778, %v784, %v785
        %v787 = vrot.slane %v759, 2
        %v788 = vsel %vm778, %v785, %v787
        %v789 = vrot.slane %v760, 2
        %v790 = vrot.slane %v761, 2
        %v791 = vsel %vm778, %v789, %v790
        %v792 = vrot.slane %v762, 2
        %v793 = vsel %vm778, %v790, %v792
        %v794 = vrot.slane %v763, 2
        %v795 = vrot.slane %v764, 2
        %v796 = vsel %vm778, %v794, %v795
        %v797 = vrot.slane %v765, 2
        %v798 = vsel %vm778, %v795, %v797
        %v807 = vadd.f32 %v744, %v781
        %v808 = vadd.f32 %v745, %v783
        %v809 = vadd.f32 %v746, %v786
        %v810 = vadd.f32 %v747, %v788
        %v811 = vadd.f32 %v748, %v791
        %v812 = vadd.f32 %v749, %v793
        %v813 = vadd.f32 %v750, %v796
        %v814 = vadd.f32 %v751, %v798
        %s815 = sld [smem:[#allocation3 + $0x3]]
        %v816 = vstv %s815
        %v817 = vmul.f32 %v667, %v816
        %v818 = vmul.f32 %v668, %v816
        %v819 = vmul.f32 %v669, %v816
        %v820 = vmul.f32 %v670, %v816
        %v821 = vmul.f32 %v671, %v816
        %v822 = vmul.f32 %v672, %v816
        %v823 = vmul.f32 %v673, %v816
        %v824 = vmul.f32 %v674, %v816
        %v825 = vmul.f32 %v675, %v816
        %v826 = vmul.f32 %v676, %v816
        %v827 = vmul.f32 %v677, %v816
        %v828 = vmul.f32 %v678, %v816
        %vm841 = vcmask 1044480
        %v842 = vrot.slane %v817, 3
        %v843 = vrot.slane %v818, 3
        %v844 = vsel %vm841, %v842, %v843
        %v845 = vrot.slane %v819, 3
        %v846 = vsel %vm841, %v843, %v845
        %v847 = vrot.slane %v820, 3
        %v848 = vrot.slane %v821, 3
        %v849 = vsel %vm841, %v847, %v848
        %v850 = vrot.slane %v822, 3
        %v851 = vsel %vm841, %v848, %v850
        %v852 = vrot.slane %v823, 3
        %v853 = vrot.slane %v824, 3
        %v854 = vsel %vm841, %v852, %v853
        %v855 = vrot.slane %v825, 3
        %v856 = vsel %vm841, %v853, %v855
        %v857 = vrot.slane %v826, 3
        %v858 = vrot.slane %v827, 3
        %v859 = vsel %vm841, %v857, %v858
        %v860 = vrot.slane %v828, 3
        %v861 = vsel %vm841, %v858, %v860
        %v870 = vadd.f32 %v807, %v844
        %v871 = vadd.f32 %v808, %v846
        %v872 = vadd.f32 %v809, %v849
        %v873 = vadd.f32 %v810, %v851
        %v874 = vadd.f32 %v811, %v854
        %v875 = vadd.f32 %v812, %v856
        %v876 = vadd.f32 %v813, %v859
        %v877 = vadd.f32 %v814, %v861
        %s878 = sld [smem:[#allocation3 + $0x4]]
        %v879 = vstv %s878
        %v880 = vmul.f32 %v667, %v879
        %v881 = vmul.f32 %v668, %v879
        %v882 = vmul.f32 %v669, %v879
        %v883 = vmul.f32 %v670, %v879
        %v884 = vmul.f32 %v671, %v879
        %v885 = vmul.f32 %v672, %v879
        %v886 = vmul.f32 %v673, %v879
        %v887 = vmul.f32 %v674, %v879
        %v888 = vmul.f32 %v675, %v879
        %v889 = vmul.f32 %v676, %v879
        %v890 = vmul.f32 %v677, %v879
        %v891 = vmul.f32 %v678, %v879
        %vm904 = vcmask 1043456
        %v905 = vrot.slane %v880, 4
        %v906 = vrot.slane %v881, 4
        %v907 = vsel %vm904, %v905, %v906
        %v908 = vrot.slane %v882, 4
        %v909 = vsel %vm904, %v906, %v908
        %v910 = vrot.slane %v883, 4
        %v911 = vrot.slane %v884, 4
        %v912 = vsel %vm904, %v910, %v911
        %v913 = vrot.slane %v885, 4
        %v914 = vsel %vm904, %v911, %v913
        %v915 = vrot.slane %v886, 4
        %v916 = vrot.slane %v887, 4
        %v917 = vsel %vm904, %v915, %v916
        %v918 = vrot.slane %v888, 4
        %v919 = vsel %vm904, %v916, %v918
        %v920 = vrot.slane %v889, 4
        %v921 = vrot.slane %v890, 4
        %v922 = vsel %vm904, %v920, %v921
        %v923 = vrot.slane %v891, 4
        %v924 = vsel %vm904, %v921, %v923
        %v933 = vadd.f32 %v870, %v907
        %v934 = vadd.f32 %v871, %v909
        %v935 = vadd.f32 %v872, %v912
        %v936 = vadd.f32 %v873, %v914
        %v937 = vadd.f32 %v874, %v917
        %v938 = vadd.f32 %v875, %v919
        %v939 = vadd.f32 %v876, %v922
        %v940 = vadd.f32 %v877, %v924
        %vm941 = vcmask 130048
        %942 = vst.msk [vmem:[%s174] sm:$0xff] %vm941, %v933
        %943 = vst.msk [vmem:[%s174 + $0x8] sm:$0xff] %vm941, %v934
        %944 = vst.msk [vmem:[%s174 + $0x10] sm:$0xff] %vm941, %v935
        %945 = vst.msk [vmem:[%s174 + $0x18] sm:$0xff] %vm941, %v936
        %946 = vst.msk [vmem:[%s174 + $0x20] sm:$0xff] %vm941, %v937
        %947 = vst.msk [vmem:[%s174 + $0x28] sm:$0xff] %vm941, %v938
        %948 = vst.msk [vmem:[%s174 + $0x30] sm:$0xff] %vm941, %v939
        %949 = vst.msk [vmem:[%s174 + $0x38] sm:$0xff] %vm941, %v940
        %s950 = sand.u32 %s75, 1
        %s951 = scalar_lea.sflag [#allocation5], %s950
        %s952 = sand.u32 %s75, 1
        %s953 = smul.addr %s952, 64
        %s954 = scalar_lea.vmem [#allocation8], %s953
        // Predicated region
        $region37: #{tpu_custom_call.1} parent=27 // pred_check
          %p955 = pneg %p85
        $region38: #{tpu_custom_call.1} parent=27 // pred_check_branch
          %957 = sbr.rel (%p955) target = $region40
        $region39: #{tpu_custom_call.1} parent=27 // pred_region
          %s958 = smul.u32 4, %s20
          %s960 = ssub.s32 1024, 1024
          %961 = vsyncadd %s951, %s960
          %s962 = smul.addr %s958, 2
          %s963 = smul.addr %s962, 128
          %s964 = scalar_lea.hbm %s2, %s963
          %s965 = sshll.u32 %s954, 4
          %s966 = int_to_ptr.vmem [resolvable:$true] %s965
          %971 = dma.vmem_to_hbm [thread:$0]  %s966, 1024, %s964, %s951, 128, 128, 8
        $region40: #{tpu_custom_call.1} parent=27 // pred_fallthru
          _
      $region28: #{tpu_custom_call.1} parent=5 // pred_fallthru
        _
      %p972 = scmp.le.s32.totalorder 2, %s15
      // Predicated region
      $region41: #{tpu_custom_call.1} parent=5 // pred_check
        %p973 = pneg %p972
      $region42: #{tpu_custom_call.1} parent=5 // pred_check_branch
        %975 = sbr.rel (%p973) target = $region44
      $region43: #{tpu_custom_call.1} parent=5 // pred_region
        %s976 = ssub.s32 %s15, 2
        // Predicated region
        $region45: #{tpu_custom_call.1} parent=43 // pred_check
          %p977 = pneg %p91
        $region46: #{tpu_custom_call.1} parent=43 // pred_check_branch
          %979 = sbr.rel (%p977) target = $region48
        $region47: #{tpu_custom_call.1} parent=43 // pred_region
          %s980 = sand.u32 %s76, 1
          %s981 = scalar_lea.sflag [#allocation5], %s980
          %s982 = sand.u32 %s76, 1
          %s983 = smul.addr %s982, 64
          %s984 = scalar_lea.vmem [#allocation8], %s983
          %985 = dma.done %s981, 1024
        $region48: #{tpu_custom_call.1} parent=43 // pred_fallthru
          _
      $region44: #{tpu_custom_call.1} parent=5 // pred_fallthru
        _
    $region6: #{tpu_custom_call.1} parent=1 // loop_footer
      %s19 = sadd.s32 1, %s15
    $region7: #{tpu_custom_call.1} parent=1 // loop_footer_branch
      %14 = sbr.rel target = $region3
    $region8: #{tpu_custom_call.1} parent=1 // loop_exit
      _
    %986 = vsyncpa [#allocation4], 1
    %s987 = scalar_lea.sflag [#allocation4], 1
    %988 = vsyncpa %s987, 1
    %989 = vsyncpa [#allocation5], 1
    %s990 = scalar_lea.sflag [#allocation5], 1
    %991 = vsyncpa %s990, 1
    %992 = vsyncpa [#allocation6], 1
    %s993 = scalar_lea.sflag [#allocation6], 1
    %994 = vsyncpa %s993, 1

</llo_original>
